<compile_context>
chip_gen: v7x
topology: tpu7x:2x2x1
jax: 0.10.0
libtpu: 0.0.40
codegen_flags: <defaults>
</compile_context>

<pallas_src>
import math

import jax
import jax.numpy as jnp
from jax.experimental import pallas as pl
from jax.experimental.pallas import tpu as pltpu


def _fma_kernel(x_ref, w_ref, b_ref, o_ref):
    # x_ref: (TB, TF) batch/feature block of the flattened input
    # w_ref, b_ref: (1, TF) fp32 "random edge" rows, broadcast over batch rows
    x = x_ref[...].astype(jnp.float32)          # fp32 compute (matches torch promotion)
    y = x * w_ref[...] + b_ref[...]             # VPU FMA, broadcast over rows
    o_ref[...] = y.astype(o_ref.dtype)          # cast back right before the store


def _vmem_limit_bytes():
    # Half of physical VMEM, capped at 64 MiB:
    #   v5e/v6e (128 MiB physical) -> 64 MiB, v7x (64 MiB physical) -> 32 MiB.
    try:
        cap = int(pltpu.get_tpu_info().vmem_capacity_bytes)
        return int(min(cap // 2, 64 * 1024 * 1024))
    except Exception:
        return 32 * 1024 * 1024


def dense_deadcode(x, w, b, *, donate_x=False, target_block_bytes=4 * 1024 * 1024):
    """y = (x * w + b).astype(x.dtype), with w/b of shape x.shape[-2:]."""
    orig_shape = x.shape
    fa, fb = orig_shape[-2], orig_shape[-1]
    f = fa * fb
    g = 1
    for d in orig_shape[:-2]:
        g *= d
    if g == 0 or f == 0:
        return x  # nothing to do for empty inputs

    itemsize = x.dtype.itemsize
    lane = 128
    sub = max(8, 32 // itemsize)        # native sublane tile: 8 f32, 16 bf16, 32 int8

    x2 = x.reshape((g, f))
    w_row = w.reshape((1, f)).astype(jnp.float32)
    b_row = b.reshape((1, f)).astype(jnp.float32)

    # Small feature dims: fold k batch rows into the lane axis so the output
    # stays lane-dense (full-width vst instead of narrow masked vst.msk).
    # W/B are tiny, so pre-tiling them host-side is free.
    if f < lane:
        k = lane // math.gcd(f, lane)   # smallest k with (k * f) % 128 == 0
        if k > 1 and g % k == 0:
            g, f = g // k, k * f
            x2 = x2.reshape((g, f))
            w_row = jnp.tile(w_row, (1, k))
            b_row = jnp.tile(b_row, (1, k))
        # else: fall through; last-dim < 128 means masked stores for this shape.

    # ---- tile-size selection ------------------------------------------------
    # Feature tile: the whole f when a sub-row-tall slab of it fits the block
    # budget, otherwise lane-aligned chunks (keeps blocks bounded for huge
    # feature maps instead of scaling with fa*fb; matters first on v7x).
    if f * itemsize * sub <= target_block_bytes:
        tf = f
    else:
        tf = max(lane, ((target_block_bytes // (sub * itemsize)) // lane) * lane)
        tf = min(tf, f)

    # Batch tile: fill the block budget with tf-wide rows, rounded to the
    # dtype's native sublane tile.
    tb = target_block_bytes // max(tf * itemsize, 1)
    tb = max(sub, (tb // sub) * sub)

    total_bytes = g * f * itemsize
    if tf == f and total_bytes > 4 * 1024 * 1024:
        # Keep >= ~4 grid steps so HBM loads, the VPU pass and writeback
        # overlap instead of degenerating to a single unpipelined block.
        tb_cap = max(sub, (pl.cdiv(g, 4) // sub) * sub)
        tb = min(tb, tb_cap)
    if tb >= g:
        tb = g                          # full-extent block (always legal)

    grid = (pl.cdiv(g, tb), pl.cdiv(f, tf))
    # Non-divisible grids use Pallas's masked partial last block: OOB lanes
    # read garbage but their stores are masked — safe because this op is
    # purely elementwise.  No jnp.pad / slice => no extra HBM passes.

    out = pl.pallas_call(
        _fma_kernel,
        out_shape=jax.ShapeDtypeStruct((g, f), x.dtype),
        grid_spec=pl.GridSpec(
            grid=grid,
            in_specs=[
                pl.BlockSpec((tb, tf), lambda i, j: (i, j)),   # x block
                pl.BlockSpec((1, tf), lambda i, j: (0, j)),    # W row chunk
                pl.BlockSpec((1, tf), lambda i, j: (0, j)),    # B row chunk
            ],
            out_specs=pl.BlockSpec((tb, tf), lambda i, j: (i, j)),
        ),
        compiler_params=pltpu.CompilerParams(
            dimension_semantics=("parallel", "parallel"),      # megacore sharding
            vmem_limit_bytes=_vmem_limit_bytes(),
        ),
        cost_estimate=pl.CostEstimate(
            flops=2 * g * f,
            transcendentals=0,
            bytes_accessed=2 * g * f * itemsize + w_row.size * 4 + b_row.size * 4,
        ),
        input_output_aliases=({0: 0} if donate_x else {}),
    )(x2, w_row, b_row)

    return out.reshape(orig_shape)


if __name__ == "__main__":
    key = jax.random.PRNGKey(0)
    kx, kw, kb = jax.random.split(key, 3)

    # small shapes consistent with the forward: NCHW-ish 4D input
    x = jax.random.normal(kx, (2, 4, 16, 16), dtype=jnp.float32)

    fa, fb = x.shape[-2], x.shape[-1]
    # deterministic stand-ins for create_random_tensor (fp32, shape (Fa, Fb))
    # TODO(synk): torch.randn draws fresh values each forward; here the random
    # "edge" tensors are generated host-side with the JAX PRNG instead.
    w = jax.random.normal(kw, (fa, fb), dtype=jnp.float32)
    b = jax.random.normal(kb, (fa, fb), dtype=jnp.float32)

    y = dense_deadcode(x, w, b)
    jax.block_until_ready(y)

    # sanity check vs plain-JAX reference
    y_ref = (x.astype(jnp.float32) * w + b).astype(x.dtype)
    assert y.shape == x.shape and y.dtype == x.dtype
    assert jnp.allclose(y, y_ref, atol=1e-6, rtol=1e-6)

    print("KERNEL_OK")
</pallas_src>

<mosaic_0001>
module attributes {stable_mosaic.version = 11 : i64} {
  func.func @_fma_kernel(%arg0: i32, %arg1: i32, %arg2: memref<8x256xf32, #tpu.memory_space<vmem>>, %arg3: memref<1x256xf32, #tpu.memory_space<vmem>>, %arg4: memref<1x256xf32, #tpu.memory_space<vmem>>, %arg5: memref<8x256xf32, #tpu.memory_space<vmem>>) attributes {dimension_semantics = [#tpu.dimension_semantics<parallel>, #tpu.dimension_semantics<parallel>], iteration_bounds = array<i64: 1, 1>, scalar_prefetch = 0 : i64, scratch_operands = 0 : i64, tpu.core_type = #tpu.core_type<tc>, window_params = [{transform_indices = @transform_0, window_bounds = array<i64: 8, 256>}, {transform_indices = @transform_1, window_bounds = array<i64: 1, 256>}, {transform_indices = @transform_2, window_bounds = array<i64: 1, 256>}, {transform_indices = @transform_3, window_bounds = array<i64: 8, 256>}]} {
    %c0 = arith.constant 0 : index
    %c0_0 = arith.constant 0 : index
    %0 = vector.load %arg2[%c0, %c0_0] : memref<8x256xf32, #tpu.memory_space<vmem>>, vector<8x256xf32>
    %c0_1 = arith.constant 0 : index
    %c0_2 = arith.constant 0 : index
    %1 = vector.load %arg3[%c0_1, %c0_2] : memref<1x256xf32, #tpu.memory_space<vmem>>, vector<1x256xf32>
    %2 = vector.broadcast %1 : vector<1x256xf32> to vector<8x256xf32>
    %3 = arith.mulf %0, %2 : vector<8x256xf32>
    %c0_3 = arith.constant 0 : index
    %c0_4 = arith.constant 0 : index
    %4 = vector.load %arg4[%c0_3, %c0_4] : memref<1x256xf32, #tpu.memory_space<vmem>>, vector<1x256xf32>
    %5 = vector.broadcast %4 : vector<1x256xf32> to vector<8x256xf32>
    %6 = arith.addf %3, %5 : vector<8x256xf32>
    %c0_5 = arith.constant 0 : index
    %c0_6 = arith.constant 0 : index
    %7 = vector.load %arg5[%c0_5, %c0_6] : memref<8x256xf32, #tpu.memory_space<vmem>>, vector<8x256xf32>
    tpu.vector_store %arg5[%c0_5, %c0_6], %6 {strides = array<i32>} : memref<8x256xf32, #tpu.memory_space<vmem>>, vector<8x256xf32>,
    return
  }
  func.func @transform_0(%arg0: i32, %arg1: i32) -> (i32, i32) {
    %c0_i32 = arith.constant 0 : i32
    return %arg0, %arg1 : i32, i32
  }
  func.func @transform_1(%arg0: i32, %arg1: i32) -> (i32, i32) {
    %c0_i32 = arith.constant 0 : i32
    %c0_i32_0 = arith.constant 0 : i32
    return %c0_i32, %arg1 : i32, i32
  }
  func.func @transform_2(%arg0: i32, %arg1: i32) -> (i32, i32) {
    %c0_i32 = arith.constant 0 : i32
    %c0_i32_0 = arith.constant 0 : i32
    return %c0_i32, %arg1 : i32, i32
  }
  func.func @transform_3(%arg0: i32, %arg1: i32) -> (i32, i32) {
    %c0_i32 = arith.constant 0 : i32
    return %arg0, %arg1 : i32, i32
  }
}

</mosaic_0001>

<llo_original>
// kernel: tpu_custom_call.1
$region0: #{tpu_custom_call.1}
  #allocation0 [shape = 'u32[]', space=smem, size = 0x4, offset = 0x4, fixed_abs, tag = 'smem constant byte address 0x4 - core index']
  #allocation1 [shape = 'u32[144,128]{1,0:T(1,128)}', space=vmem, size = 0x12000, scoped, tag = 'internal scratch']
  %s0 = inlined_call_operand.hbm [shape: f32[8,256], index: 0, kind: input, shape index: {}]
  %s1 = inlined_call_operand.vmem [shape: f32[1,256], index: 1, kind: input, shape index: {}]
  %s2 = inlined_call_operand.vmem [shape: f32[1,256], index: 2, kind: input, shape index: {}]
  %s3 = inlined_call_operand.hbm [shape: f32[8,256], index: 3, kind: output, shape index: {}]
  %s4 = sld [smem:[#allocation0]]
  $region26: #{tpu_custom_call.1} parent=0
    _
  %s6 = ssub.s32 1, %s4
  %s7 = scalar_select 0, %s6, %s4
  $region1: #{tpu_custom_call.1} parent=0
    #allocation2 [shape = 'u8[8192]{0}', space=vmem, size = 0x2000, scoped, tag = 'input window, operand 0, single buffered']
    #allocation3 [shape = 's32[1]{0}', space=sflag, size = 0x4, scoped, tag = 'scoped memory for tpu_custom_call.1']
    #allocation4 [shape = 's32[1]{0}', space=sflag, size = 0x4, scoped, tag = 'scoped memory for tpu_custom_call.1']
    #allocation5 [shape = 'u8[8192]{0}', space=vmem, size = 0x2000, scoped, tag = 'output window, operand 0, single buffered']
    %8 = vsyncpa [#allocation3], 0
    %9 = vsyncpa [#allocation4], 0
    // Predicated region
    $region2: #{tpu_custom_call.1} parent=1 // pred_check
      _
    $region3: #{tpu_custom_call.1} parent=1 // pred_check_branch
      %11 = sbr.rel (0) target = $region5
    $region4: #{tpu_custom_call.1} parent=1 // pred_region
      %s13 = ssub.s32 256, 256
      %14 = vsyncadd [#allocation3], %s13
      %s16 = sshll.u32 [#allocation2], 4
      %s17 = int_to_ptr.vmem [resolvable:$true] %s16
      %19 = dma.hbm_to_vmem [thread:$0]  %s0, 256, %s17, [#allocation3]
    $region5: #{tpu_custom_call.1} parent=1 // pred_fallthru
      _
    // Predicated region
    $region6: #{tpu_custom_call.1} parent=1 // pred_check
      _
    $region7: #{tpu_custom_call.1} parent=1 // pred_check_branch
      %21 = sbr.rel (0) target = $region9
    $region8: #{tpu_custom_call.1} parent=1 // pred_region
      _
    $region9: #{tpu_custom_call.1} parent=1 // pred_fallthru
      _
    // Predicated region
    $region10: #{tpu_custom_call.1} parent=1 // pred_check
      _
    $region11: #{tpu_custom_call.1} parent=1 // pred_check_branch
      %23 = sbr.rel (0) target = $region13
    $region12: #{tpu_custom_call.1} parent=1 // pred_region
      _
    $region13: #{tpu_custom_call.1} parent=1 // pred_fallthru
      _
    // Predicated region
    $region14: #{tpu_custom_call.1} parent=1 // pred_check
      _
    $region15: #{tpu_custom_call.1} parent=1 // pred_check_branch
      %25 = sbr.rel (0) target = $region17
    $region16: #{tpu_custom_call.1} parent=1 // pred_region
      %26 = dma.done [#allocation3], 256
    $region17: #{tpu_custom_call.1} parent=1 // pred_fallthru
      _
    %v27 = vld [vmem:[#allocation2] sm:$0xff]
    %v28 = vld [vmem:[#allocation2 + $0x8] sm:$0xff]
    %v29 = vld [vmem:[%s1] sm:$0x3]
    %v31 = vlaneseq
    %v32 = vshrl.u32 %v31, 7
    %v33 = vsub.s32 0, %v32
    %v34 = vrot.slane %v29, %v33
    %v35 = vlaneseq
    %v36 = vshrl.u32 %v35, 7
    %v37 = vsub.s32 1, %v36
    %v38 = vrot.slane %v29, %v37
    %v41 = vmul.f32 %v27, %v34
    %v42 = vmul.f32 %v28, %v38
    %v43 = vld [vmem:[%s2] sm:$0x3]
    %v45 = vlaneseq
    %v46 = vshrl.u32 %v45, 7
    %v47 = vsub.s32 0, %v46
    %v48 = vrot.slane %v43, %v47
    %v49 = vlaneseq
    %v50 = vshrl.u32 %v49, 7
    %v51 = vsub.s32 1, %v50
    %v52 = vrot.slane %v43, %v51
    %v55 = vadd.f32 %v41, %v48
    %v56 = vadd.f32 %v42, %v52
    %57 = vst [vmem:[#allocation5] sm:$0xff] %v55
    %58 = vst [vmem:[#allocation5 + $0x8] sm:$0xff] %v56
    // Predicated region
    $region18: #{tpu_custom_call.1} parent=1 // pred_check
      _
    $region19: #{tpu_custom_call.1} parent=1 // pred_check_branch
      %60 = sbr.rel (0) target = $region21
    $region20: #{tpu_custom_call.1} parent=1 // pred_region
      %s62 = ssub.s32 256, 256
      %63 = vsyncadd [#allocation4], %s62
      %s65 = sshll.u32 [#allocation5], 4
      %s66 = int_to_ptr.vmem [resolvable:$true] %s65
      %68 = dma.vmem_to_hbm [thread:$0]  %s66, 256, %s3, [#allocation4]
    $region21: #{tpu_custom_call.1} parent=1 // pred_fallthru
      _
    // Predicated region
    $region22: #{tpu_custom_call.1} parent=1 // pred_check
      _
    $region23: #{tpu_custom_call.1} parent=1 // pred_check_branch
      %70 = sbr.rel (0) target = $region25
    $region24: #{tpu_custom_call.1} parent=1 // pred_region
      %71 = dma.done [#allocation4], 256
    $region25: #{tpu_custom_call.1} parent=1 // pred_fallthru
      _
    %72 = vsyncpa [#allocation3], 1
    %73 = vsyncpa [#allocation4], 1

</llo_original>
